<compile_context>
chip_gen: v6e
topology: v6e:2x2x1
jax: 0.10.0
libtpu: 0.0.40
codegen_flags: <defaults>
</compile_context>

<pallas_src>
import functools

import jax
import jax.numpy as jnp
from jax.experimental import pallas as pl
from jax.experimental.pallas import tpu as pltpu


def _gcn_fused_kernel(a_ref, x_ref, noise_ref, *rest,
                      num_layers, noise_d, layer_dims):
    w_refs = rest[:num_layers]
    o_ref = rest[num_layers]

    a = a_ref[...]                             # (N, N) bf16 adjacency
    h = x_ref[...].astype(jnp.float32)         # (N, F0) f32 running state
    h_noise = None
    n_rows = h.shape[0]

    for i in range(num_layers):
        f_in, f_out = layer_dims[i]
        w = w_refs[i][...]                     # (F_in, F_out) bf16
        last = (i == num_layers - 1)

        if h_noise is None:
            # Single branch.  Choose association so the N^2 contraction touches
            # min(F_in, F_out) lanes.  bf16 x bf16 MXU dots, f32 accumulation.
            if f_in <= f_out:
                ah = jnp.dot(a, h.astype(a.dtype),
                             preferred_element_type=jnp.float32)
                out = jnp.dot(ah.astype(w.dtype), w,
                              preferred_element_type=jnp.float32)
            else:
                hw = jnp.dot(h.astype(w.dtype), w,
                             preferred_element_type=jnp.float32)
                out = jnp.dot(a, hw.astype(a.dtype),
                              preferred_element_type=jnp.float32)
            if not last:
                out = jnp.maximum(out, 0.0)    # ReLU activation
            h = out
            if noise_d == i:
                h_noise = h + noise_ref[...].astype(jnp.float32)
        else:
            # Both branches active: one shared A_hat matmul over the lane-concat
            # [Y | Y_noise] and one row-stacked weight matmul — all in registers.
            if f_in <= f_out:
                # Aggregate first:  A @ [H | H_noise]  then  (.) @ W row-stacked.
                y_cat = jnp.concatenate([h, h_noise], axis=1).astype(a.dtype)
                a_cat = jnp.dot(a, y_cat, preferred_element_type=jnp.float32)
                stacked = jnp.concatenate(
                    [a_cat[:, :f_in], a_cat[:, f_in:]], axis=0).astype(w.dtype)
                ow = jnp.dot(stacked, w, preferred_element_type=jnp.float32)
                out, out_n = ow[:n_rows], ow[n_rows:]
            else:
                # Weight first:  [H ; H_noise] @ W  then  A @ [Y | Y_noise].
                stacked = jnp.concatenate([h, h_noise], axis=0).astype(w.dtype)
                yw = jnp.dot(stacked, w, preferred_element_type=jnp.float32)
                y_cat = jnp.concatenate(
                    [yw[:n_rows], yw[n_rows:]], axis=1).astype(a.dtype)
                a_cat = jnp.dot(a, y_cat, preferred_element_type=jnp.float32)
                out, out_n = a_cat[:, :f_out], a_cat[:, f_out:]
            if not last:
                out = jnp.maximum(out, 0.0)
                out_n = jnp.maximum(out_n, 0.0)
            h, h_noise = out, out_n

    # torch.cat((h_noise, h), 1), fused into ONE full-width output store
    # (both slices share the same 128-lane tile; one vst instead of two masked).
    o_ref[...] = jnp.concatenate([h_noise, h], axis=1).astype(o_ref.dtype)


def gcn_forward(a_hat, features, noise, noise_d, weights):
    """Mirrors GCN.forward (eval mode): noise injected after layer `noise_d`,
    the noisy branch re-run through all subsequent layers, outputs concatenated."""
    n = a_hat.shape[0]
    num_layers = len(weights)
    layer_dims = tuple((int(w.shape[0]), int(w.shape[1])) for w in weights)
    n_classes = layer_dims[-1][1]

    # Guard the fragile cases (original module would also fail on these).
    assert 0 <= noise_d < num_layers, "noise_d must index a GraphConv layer"
    assert noise.shape == (n, layer_dims[noise_d][1]), "noise width mismatch"

    # MXU operands in bf16 (f32 accumulation inside the kernel).
    a_in = a_hat.astype(jnp.bfloat16)
    w_in = [w.astype(jnp.bfloat16) for w in weights]

    # Advisory cost estimate so XLA can schedule around the fused kernel.
    flops = 0
    for i, (fi, fo) in enumerate(layer_dims):
        branches = 2 if i > noise_d else 1
        flops += branches * (2 * n * n * min(fi, fo) + 2 * n * fi * fo)
    out_bytes = n * 2 * n_classes * features.dtype.itemsize
    bytes_accessed = int(
        a_in.size * a_in.dtype.itemsize
        + features.size * features.dtype.itemsize
        + noise.size * noise.dtype.itemsize
        + sum(w.size * w.dtype.itemsize for w in w_in)
        + out_bytes)

    # Explicit scoped-VMEM budget: defaults (16 MiB v5e / 32 MiB v6e,v7x) are far
    # below physical.  Size from the resident operands plus generous headroom for
    # the in-register working set, clamped to stay safely under v7x's 64 MiB.
    vmem_limit = int(min(56 << 20, max(16 << 20, 6 * bytes_accessed)))

    kernel = functools.partial(
        _gcn_fused_kernel,
        num_layers=num_layers, noise_d=noise_d, layer_dims=layer_dims)

    vmem = pl.BlockSpec(memory_space=pltpu.MemorySpace.VMEM)
    return pl.pallas_call(
        kernel,
        out_shape=jax.ShapeDtypeStruct((n, 2 * n_classes), features.dtype),
        in_specs=[vmem] * (3 + num_layers),
        out_specs=vmem,
        compiler_params=pltpu.CompilerParams(vmem_limit_bytes=vmem_limit),
        cost_estimate=pl.CostEstimate(
            flops=flops, transcendentals=0, bytes_accessed=bytes_accessed),
    )(a_in, features, noise, *w_in)


def build_normalized_adj(n, dtype=jnp.float32):
    # Synthetic graph: ring + self-loops, then D^{-1/2} A D^{-1/2}.
    idx = jnp.arange(n)
    a = jnp.eye(n, dtype=dtype)
    a = a.at[idx, (idx + 1) % n].set(1.0)
    a = a.at[idx, (idx - 1) % n].set(1.0)
    deg = a.sum(axis=1)
    d_inv_sqrt = 1.0 / jnp.sqrt(deg)
    return a * d_inv_sqrt[:, None] * d_inv_sqrt[None, :]


if __name__ == "__main__":
    key = jax.random.PRNGKey(0)

    # Small, module-consistent shapes.
    N = 16          # number of graph nodes
    in_feats = 8
    n_hidden = 32
    n_classes = 4
    n_layers = 2    # => 1 + (n_layers - 1) + 1 = 3 GraphConv layers
    noise_d = 1     # inject noise after layer index 1 (hidden-sized output)

    layer_dims = [(in_feats, n_hidden)]
    for _ in range(n_layers - 1):
        layer_dims.append((n_hidden, n_hidden))
    layer_dims.append((n_hidden, n_classes))

    keys = jax.random.split(key, len(layer_dims) + 3)
    weights = []
    for (fi, fo), wk in zip(layer_dims, keys[: len(layer_dims)]):
        # Deterministic Glorot-uniform-style init.
        limit = (6.0 / (fi + fo)) ** 0.5
        weights.append(
            jax.random.uniform(wk, (fi, fo), jnp.float32, -limit, limit)
        )

    features = jax.random.normal(keys[-3], (N, in_feats), jnp.float32)
    noise = 0.1 * jax.random.normal(keys[-2], (N, n_hidden), jnp.float32)
    a_hat = build_normalized_adj(N)

    out = gcn_forward(a_hat, features, noise, noise_d, weights)
    jax.block_until_ready(out)

    assert out.shape == (N, 2 * n_classes), out.shape
    assert bool(jnp.all(jnp.isfinite(out)))
    print("KERNEL_OK")
</pallas_src>

<mosaic_0001>
module attributes {stable_mosaic.version = 11 : i64} {
  func.func @_gcn_fused_kernel(%arg0: memref<16x16xbf16, #tpu.memory_space<vmem>>, %arg1: memref<16x8xf32, #tpu.memory_space<vmem>>, %arg2: memref<16x32xf32, #tpu.memory_space<vmem>>, %arg3: memref<8x32xbf16, #tpu.memory_space<vmem>>, %arg4: memref<32x32xbf16, #tpu.memory_space<vmem>>, %arg5: memref<32x4xbf16, #tpu.memory_space<vmem>>, %arg6: memref<16x8xf32, #tpu.memory_space<vmem>>) attributes {dimension_semantics = [], scalar_prefetch = 0 : i64, scratch_operands = 0 : i64, tpu.core_type = #tpu.core_type<tc>} {
    %c0 = arith.constant 0 : index
    %c0_0 = arith.constant 0 : index
    %0 = vector.load %arg0[%c0, %c0_0] : memref<16x16xbf16, #tpu.memory_space<vmem>>, vector<16x16xbf16>
    %c0_1 = arith.constant 0 : index
    %c0_2 = arith.constant 0 : index
    %1 = vector.load %arg1[%c0_1, %c0_2] : memref<16x8xf32, #tpu.memory_space<vmem>>, vector<16x8xf32>
    %c0_3 = arith.constant 0 : index
    %c0_4 = arith.constant 0 : index
    %2 = vector.load %arg3[%c0_3, %c0_4] : memref<8x32xbf16, #tpu.memory_space<vmem>>, vector<8x32xbf16>
    %3 = arith.truncf %1 : vector<16x8xf32> to vector<16x8xbf16>
    %cst = arith.constant dense<0.000000e+00> : vector<16x8xf32>
    %4 = tpu.matmul %0, %3, %cst {dimension_numbers = #tpu.dot_dimension_numbers<[1], [0], [0], [1], [0, 0, 1, 1], [], []>} : vector<16x16xbf16>, vector<16x8xbf16>, vector<16x8xf32> -> vector<16x8xf32>
    %5 = arith.truncf %4 : vector<16x8xf32> to vector<16x8xbf16>
    %cst_5 = arith.constant dense<0.000000e+00> : vector<16x32xf32>
    %6 = tpu.matmul %5, %2, %cst_5 {dimension_numbers = #tpu.dot_dimension_numbers<[1], [0], [0], [1], [0, 0, 1, 1], [], []>} : vector<16x8xbf16>, vector<8x32xbf16>, vector<16x32xf32> -> vector<16x32xf32>
    %cst_6 = arith.constant 0.000000e+00 : f32
    %7 = vector.broadcast %cst_6 : f32 to vector<16x32xf32>
    %8 = arith.maximumf %6, %7 : vector<16x32xf32>
    %c0_7 = arith.constant 0 : index
    %c0_8 = arith.constant 0 : index
    %9 = vector.load %arg4[%c0_7, %c0_8] : memref<32x32xbf16, #tpu.memory_space<vmem>>, vector<32x32xbf16>
    %10 = arith.truncf %8 : vector<16x32xf32> to vector<16x32xbf16>
    %cst_9 = arith.constant dense<0.000000e+00> : vector<16x32xf32>
    %11 = tpu.matmul %0, %10, %cst_9 {dimension_numbers = #tpu.dot_dimension_numbers<[1], [0], [0], [1], [0, 0, 1, 1], [], []>} : vector<16x16xbf16>, vector<16x32xbf16>, vector<16x32xf32> -> vector<16x32xf32>
    %12 = arith.truncf %11 : vector<16x32xf32> to vector<16x32xbf16>
    %cst_10 = arith.constant dense<0.000000e+00> : vector<16x32xf32>
    %13 = tpu.matmul %12, %9, %cst_10 {dimension_numbers = #tpu.dot_dimension_numbers<[1], [0], [0], [1], [0, 0, 1, 1], [], []>} : vector<16x32xbf16>, vector<32x32xbf16>, vector<16x32xf32> -> vector<16x32xf32>
    %cst_11 = arith.constant 0.000000e+00 : f32
    %14 = vector.broadcast %cst_11 : f32 to vector<16x32xf32>
    %15 = arith.maximumf %13, %14 : vector<16x32xf32>
    %c0_12 = arith.constant 0 : index
    %c0_13 = arith.constant 0 : index
    %16 = vector.load %arg2[%c0_12, %c0_13] : memref<16x32xf32, #tpu.memory_space<vmem>>, vector<16x32xf32>
    %17 = arith.addf %15, %16 : vector<16x32xf32>
    %c0_14 = arith.constant 0 : index
    %c0_15 = arith.constant 0 : index
    %18 = vector.load %arg5[%c0_14, %c0_15] : memref<32x4xbf16, #tpu.memory_space<vmem>>, vector<32x4xbf16>
    %19 = tpu.concatenate %15, %17 in 0 : vector<16x32xf32>, vector<16x32xf32> -> vector<32x32xf32>
    %20 = arith.truncf %19 : vector<32x32xf32> to vector<32x32xbf16>
    %cst_16 = arith.constant dense<0.000000e+00> : vector<32x4xf32>
    %21 = tpu.matmul %20, %18, %cst_16 {dimension_numbers = #tpu.dot_dimension_numbers<[1], [0], [0], [1], [0, 0, 1, 1], [], []>} : vector<32x32xbf16>, vector<32x4xbf16>, vector<32x4xf32> -> vector<32x4xf32>
    %22 = vector.extract_strided_slice %21 {offsets = [0, 0], sizes = [16, 4], strides = [1, 1]} : vector<32x4xf32> to vector<16x4xf32>
    %23 = vector.extract_strided_slice %21 {offsets = [16, 0], sizes = [16, 4], strides = [1, 1]} : vector<32x4xf32> to vector<16x4xf32>
    %24 = tpu.concatenate %22, %23 in 1 : vector<16x4xf32>, vector<16x4xf32> -> vector<16x8xf32>
    %25 = arith.truncf %24 : vector<16x8xf32> to vector<16x8xbf16>
    %cst_17 = arith.constant dense<0.000000e+00> : vector<16x8xf32>
    %26 = tpu.matmul %0, %25, %cst_17 {dimension_numbers = #tpu.dot_dimension_numbers<[1], [0], [0], [1], [0, 0, 1, 1], [], []>} : vector<16x16xbf16>, vector<16x8xbf16>, vector<16x8xf32> -> vector<16x8xf32>
    %27 = vector.extract_strided_slice %26 {offsets = [0, 0], sizes = [16, 4], strides = [1, 1]} : vector<16x8xf32> to vector<16x4xf32>
    %28 = vector.extract_strided_slice %26 {offsets = [0, 4], sizes = [16, 4], strides = [1, 1]} : vector<16x8xf32> to vector<16x4xf32>
    %29 = tpu.concatenate %28, %27 in 1 : vector<16x4xf32>, vector<16x4xf32> -> vector<16x8xf32>
    %c0_18 = arith.constant 0 : index
    %c0_19 = arith.constant 0 : index
    %30 = vector.load %arg6[%c0_18, %c0_19] : memref<16x8xf32, #tpu.memory_space<vmem>>, vector<16x8xf32>
    tpu.vector_store %arg6[%c0_18, %c0_19], %29 {strides = array<i32>} : memref<16x8xf32, #tpu.memory_space<vmem>>, vector<16x8xf32>,
    return
  }
}

</mosaic_0001>

<llo_original>
// kernel: tpu_custom_call.1
$region0: #{tpu_custom_call.1}
  #allocation0 [shape = 'u32[]', space=smem, size = 0x4, offset = 0x4, fixed_abs, tag = 'smem constant byte address 0x4 - core index']
  #allocation1 [shape = 'u32[144,128]{1,0:T(1,128)}', space=vmem, size = 0x12000, scoped, tag = 'internal scratch']
  %s0 = inlined_call_operand.vmem [shape: bf16[16,16], index: 0, kind: input, shape index: {}]
  %s1 = inlined_call_operand.vmem [shape: f32[16,8], index: 1, kind: input, shape index: {}]
  %s2 = inlined_call_operand.vmem [shape: f32[16,32], index: 2, kind: input, shape index: {}]
  %s3 = inlined_call_operand.vmem [shape: bf16[8,32], index: 3, kind: input, shape index: {}]
  %s4 = inlined_call_operand.vmem [shape: bf16[32,32], index: 4, kind: input, shape index: {}]
  %s5 = inlined_call_operand.vmem [shape: bf16[32,4], index: 5, kind: input, shape index: {}]
  %s6 = inlined_call_operand.vmem [shape: f32[16,8], index: 6, kind: output, shape index: {}]
  %s7 = sld [smem:[#allocation0]]
  $region34: #{tpu_custom_call.1} parent=0
    _
  %s9 = ssub.s32 1, %s7
  %s10 = scalar_select 0, %s9, %s7
  // Predicated region
  $region2: #{tpu_custom_call.1} parent=0 // pred_check
    _
  $region3: #{tpu_custom_call.1} parent=0 // pred_check_branch
    %12 = sbr.rel (0) target = $region5
  $region4: #{tpu_custom_call.1} parent=0 // pred_region
    _
  $region5: #{tpu_custom_call.1} parent=0 // pred_fallthru
    _
  // Predicated region
  $region6: #{tpu_custom_call.1} parent=0 // pred_check
    _
  $region7: #{tpu_custom_call.1} parent=0 // pred_check_branch
    %14 = sbr.rel (0) target = $region9
  $region8: #{tpu_custom_call.1} parent=0 // pred_region
    _
  $region9: #{tpu_custom_call.1} parent=0 // pred_fallthru
    _
  // Predicated region
  $region10: #{tpu_custom_call.1} parent=0 // pred_check
    _
  $region11: #{tpu_custom_call.1} parent=0 // pred_check_branch
    %16 = sbr.rel (0) target = $region13
  $region12: #{tpu_custom_call.1} parent=0 // pred_region
    _
  $region13: #{tpu_custom_call.1} parent=0 // pred_fallthru
    _
  // Predicated region
  $region14: #{tpu_custom_call.1} parent=0 // pred_check
    _
  $region15: #{tpu_custom_call.1} parent=0 // pred_check_branch
    %18 = sbr.rel (0) target = $region17
  $region16: #{tpu_custom_call.1} parent=0 // pred_region
    _
  $region17: #{tpu_custom_call.1} parent=0 // pred_fallthru
    _
  // Predicated region
  $region18: #{tpu_custom_call.1} parent=0 // pred_check
    _
  $region19: #{tpu_custom_call.1} parent=0 // pred_check_branch
    %20 = sbr.rel (0) target = $region21
  $region20: #{tpu_custom_call.1} parent=0 // pred_region
    _
  $region21: #{tpu_custom_call.1} parent=0 // pred_fallthru
    _
  // Predicated region
  $region22: #{tpu_custom_call.1} parent=0 // pred_check
    _
  $region23: #{tpu_custom_call.1} parent=0 // pred_check_branch
    %22 = sbr.rel (0) target = $region25
  $region24: #{tpu_custom_call.1} parent=0 // pred_region
    _
  $region25: #{tpu_custom_call.1} parent=0 // pred_fallthru
    _
  %v24 = vld [vmem:[%s0] sm:$0xf]
  %v25 = vld [vmem:[%s0 + $0x4] sm:$0xf]
  %v26 = vld [vmem:[%s1] sm:$0xff]
  %v27 = vld [vmem:[%s1 + $0x8] sm:$0xff]
  %v28 = vld [vmem:[%s3] sm:$0xf]
  %v29 = vpack.c.bf16 %v27, %v26
  %v32 = vunpack.c.l.b16 %v24
  %v33 = vunpack.c.l.b16 %v25
  %v34 = vpack.c.b16 %v33, %v32
  %vm35 = vcmask 130048
  %v37 = vsel %vm35, %v34, 0
  %39 = vmatprep.subr.bf16.mxu0 0
  %40 = vmatpush1.bf16.msra.mxu0 0
  %41 = vmatprep.subr.bf16.mxu0 0
  %42 = vmatpush1.bf16.msra.mxu0 0
  %43 = vmatprep.subr.bf16.mxu0 0
  %44 = vmatpush1.bf16.msra.mxu0 0
  %45 = vmatprep.subr.bf16.mxu0 0
  %46 = vmatpush1.bf16.msra.mxu0 0
  %47 = vmatprep.subr.bf16.mxu0 0
  %48 = vmatpush1.bf16.msra.mxu0 0
  %49 = vmatprep.subr.bf16.mxu0 0
  %50 = vmatpush1.bf16.msra.mxu0 0
  %51 = vmatprep.subr.bf16.mxu0 0
  %52 = vmatpush1.bf16.msra.mxu0 0
  %53 = vmatprep.subr.bf16.mxu0 0
  %54 = vmatpush1.bf16.msra.mxu0 %v29
  %55 = vmatprep.subr.bf16.mxu0 0
  %56 = vmatpush2.bf16.msra.mxu0 0
  %57 = vmatprep.subr.bf16.mxu0 0
  %58 = vmatpush2.bf16.msra.mxu0 0
  %59 = vmatprep.subr.bf16.mxu0 0
  %60 = vmatpush2.bf16.msra.mxu0 0
  %61 = vmatprep.subr.bf16.mxu0 0
  %62 = vmatpush2.bf16.msra.mxu0 0
  %63 = vmatprep.subr.bf16.mxu0 0
  %64 = vmatpush2.bf16.msra.mxu0 0
  %65 = vmatprep.subr.bf16.mxu0 0
  %66 = vmatpush2.bf16.msra.mxu0 0
  %67 = vmatprep.subr.bf16.mxu0 0
  %68 = vmatpush2.bf16.msra.mxu0 0
  %69 = vmatprep.subr.bf16.mxu0 0
  %70 = vmatpush2.bf16.msra.mxu0 0
  %71 = vmatprep.mubr.bf16.mxu0 0
  %72 = vmatmul.mubr.bf16.gmra.mxu0 %v37
  %v73 = vpop.f32.mrf.mxu0
  %v74 = vadd.f32 0.0, %v73
  %v75 = vpop.f32.mrf.mxu0
  %v76 = vpop.f32.mrf.mxu0
  %v77 = vadd.f32 0.0, %v76
  %v78 = vpop.f32.mrf.mxu0
  %79 = vdwg.mxu0
  %v80 = vpack.c.bf16 %v77, %v74
  %vm81 = vcmask 64512
  %v83 = vsel %vm81, %v80, 0
  %vm85 = vcmask 1043456
  %v87 = vsel %vm85, %v28, 0
  %89 = vmatprep.subr.bf16.mxu0 0
  %90 = vmatpush1.bf16.msra.mxu0 0
  %91 = vmatprep.subr.bf16.mxu0 0
  %92 = vmatpush1.bf16.msra.mxu0 0
  %93 = vmatprep.subr.bf16.mxu0 0
  %94 = vmatpush1.bf16.msra.mxu0 0
  %95 = vmatprep.subr.bf16.mxu0 0
  %96 = vmatpush1.bf16.msra.mxu0 0
  %97 = vmatprep.subr.bf16.mxu0 0
  %98 = vmatpush1.bf16.msra.mxu0 0
  %99 = vmatprep.subr.bf16.mxu0 0
  %100 = vmatpush1.bf16.msra.mxu0 0
  %101 = vmatprep.subr.bf16.mxu0 0
  %102 = vmatpush1.bf16.msra.mxu0 0
  %103 = vmatprep.subr.bf16.mxu0 0
  %104 = vmatpush1.bf16.msra.mxu0 %v87
  %105 = vmatprep.subr.bf16.mxu0 0
  %106 = vmatpush2.bf16.msra.mxu0 0
  %107 = vmatprep.subr.bf16.mxu0 0
  %108 = vmatpush2.bf16.msra.mxu0 0
  %109 = vmatprep.subr.bf16.mxu0 0
  %110 = vmatpush2.bf16.msra.mxu0 0
  %111 = vmatprep.subr.bf16.mxu0 0
  %112 = vmatpush2.bf16.msra.mxu0 0
  %113 = vmatprep.subr.bf16.mxu0 0
  %114 = vmatpush2.bf16.msra.mxu0 0
  %115 = vmatprep.subr.bf16.mxu0 0
  %116 = vmatpush2.bf16.msra.mxu0 0
  %117 = vmatprep.subr.bf16.mxu0 0
  %118 = vmatpush2.bf16.msra.mxu0 0
  %119 = vmatprep.subr.bf16.mxu0 0
  %120 = vmatpush2.bf16.msra.mxu0 0
  %121 = vmatprep.mubr.bf16.mxu0 0
  %122 = vmatmul.mubr.bf16.gmra.mxu0 %v83
  %v123 = vpop.f32.mrf.mxu0
  %v124 = vadd.f32 0.0, %v123
  %v125 = vpop.f32.mrf.mxu0
  %v126 = vpop.f32.mrf.mxu0
  %v127 = vadd.f32 0.0, %v126
  %v128 = vpop.f32.mrf.mxu0
  %129 = vdwg.mxu0
  %v130 = vmax.f32 %v124, 0.0
  %v131 = vmax.f32 %v127, 0.0
  %v132 = vld [vmem:[%s4] sm:$0xf]
  %v133 = vld [vmem:[%s4 + $0x4] sm:$0xf]
  %v134 = vld [vmem:[%s4 + $0x8] sm:$0xf]
  %v135 = vld [vmem:[%s4 + $0xc] sm:$0xf]
  %v136 = vpack.c.bf16 %v131, %v130
  %137 = vmatprep.subr.bf16.mxu0 0
  %138 = vmatpush1.bf16.msra.mxu0 0
  %139 = vmatprep.subr.bf16.mxu0 0
  %140 = vmatpush1.bf16.msra.mxu0 0
  %141 = vmatprep.subr.bf16.mxu0 0
  %142 = vmatpush1.bf16.msra.mxu0 0
  %143 = vmatprep.subr.bf16.mxu0 0
  %144 = vmatpush1.bf16.msra.mxu0 0
  %145 = vmatprep.subr.bf16.mxu0 0
  %146 = vmatpush1.bf16.msra.mxu0 0
  %147 = vmatprep.subr.bf16.mxu0 0
  %148 = vmatpush1.bf16.msra.mxu0 0
  %149 = vmatprep.subr.bf16.mxu0 0
  %150 = vmatpush1.bf16.msra.mxu0 0
  %151 = vmatprep.subr.bf16.mxu0 0
  %152 = vmatpush1.bf16.msra.mxu0 %v136
  %153 = vmatprep.subr.bf16.mxu0 0
  %154 = vmatpush2.bf16.msra.mxu0 0
  %155 = vmatprep.subr.bf16.mxu0 0
  %156 = vmatpush2.bf16.msra.mxu0 0
  %157 = vmatprep.subr.bf16.mxu0 0
  %158 = vmatpush2.bf16.msra.mxu0 0
  %159 = vmatprep.subr.bf16.mxu0 0
  %160 = vmatpush2.bf16.msra.mxu0 0
  %161 = vmatprep.subr.bf16.mxu0 0
  %162 = vmatpush2.bf16.msra.mxu0 0
  %163 = vmatprep.subr.bf16.mxu0 0
  %164 = vmatpush2.bf16.msra.mxu0 0
  %165 = vmatprep.subr.bf16.mxu0 0
  %166 = vmatpush2.bf16.msra.mxu0 0
  %167 = vmatprep.subr.bf16.mxu0 0
  %168 = vmatpush2.bf16.msra.mxu0 0
  %169 = vmatprep.mubr.bf16.mxu0 0
  %170 = vmatmul.mubr.bf16.gmra.mxu0 %v37
  %v171 = vpop.f32.mrf.mxu0
  %v172 = vadd.f32 0.0, %v171
  %v173 = vpop.f32.mrf.mxu0
  %v174 = vpop.f32.mrf.mxu0
  %v175 = vadd.f32 0.0, %v174
  %v176 = vpop.f32.mrf.mxu0
  %177 = vdwg.mxu0
  %v178 = vpack.c.bf16 %v175, %v172
  %v183 = vunpack.c.l.b16 %v132
  %v184 = vunpack.c.l.b16 %v133
  %v185 = vunpack.c.l.b16 %v134
  %v186 = vunpack.c.l.b16 %v135
  %v187 = vpack.c.b16 %v184, %v183
  %v188 = vpack.c.b16 %v186, %v185
  %vm191 = vcmask 261120
  %v193 = vsel %vm191, %v178, 0
  %195 = vmatprep.subr.bf16.mxu0 0
  %196 = vmatpush1.bf16.msra.mxu0 0
  %197 = vmatprep.subr.bf16.mxu0 0
  %198 = vmatpush1.bf16.msra.mxu0 0
  %199 = vmatprep.subr.bf16.mxu0 0
  %200 = vmatpush1.bf16.msra.mxu0 0
  %201 = vmatprep.subr.bf16.mxu0 0
  %202 = vmatpush1.bf16.msra.mxu0 0
  %203 = vmatprep.subr.bf16.mxu0 0
  %204 = vmatpush1.bf16.msra.mxu0 0
  %205 = vmatprep.subr.bf16.mxu0 0
  %206 = vmatpush1.bf16.msra.mxu0 0
  %207 = vmatprep.subr.bf16.mxu0 0
  %208 = vmatpush1.bf16.msra.mxu0 %v188
  %209 = vmatprep.subr.bf16.mxu0 0
  %210 = vmatpush1.bf16.msra.mxu0 %v187
  %211 = vmatprep.subr.bf16.mxu0 0
  %212 = vmatpush2.bf16.msra.mxu0 0
  %213 = vmatprep.subr.bf16.mxu0 0
  %214 = vmatpush2.bf16.msra.mxu0 0
  %215 = vmatprep.subr.bf16.mxu0 0
  %216 = vmatpush2.bf16.msra.mxu0 0
  %217 = vmatprep.subr.bf16.mxu0 0
  %218 = vmatpush2.bf16.msra.mxu0 0
  %219 = vmatprep.subr.bf16.mxu0 0
  %220 = vmatpush2.bf16.msra.mxu0 0
  %221 = vmatprep.subr.bf16.mxu0 0
  %222 = vmatpush2.bf16.msra.mxu0 0
  %223 = vmatprep.subr.bf16.mxu0 0
  %224 = vmatpush2.bf16.msra.mxu0 0
  %225 = vmatprep.subr.bf16.mxu0 0
  %226 = vmatpush2.bf16.msra.mxu0 0
  %227 = vmatprep.mubr.bf16.mxu0 0
  %228 = vmatmul.mubr.bf16.gmra.mxu0 %v193
  %v229 = vpop.f32.mrf.mxu0
  %v230 = vadd.f32 0.0, %v229
  %v231 = vpop.f32.mrf.mxu0
  %v232 = vpop.f32.mrf.mxu0
  %v233 = vadd.f32 0.0, %v232
  %v234 = vpop.f32.mrf.mxu0
  %235 = vdwg.mxu0
  %v236 = vmax.f32 %v230, 0.0
  %v237 = vmax.f32 %v233, 0.0
  %v238 = vld [vmem:[%s2] sm:$0xff]
  %v239 = vld [vmem:[%s2 + $0x8] sm:$0xff]
  %v240 = vadd.f32 %v236, %v238
  %v241 = vadd.f32 %v237, %v239
  %v242 = vld [vmem:[%s5] sm:$0xf]
  %v243 = vld [vmem:[%s5 + $0x4] sm:$0xf]
  %v244 = vld [vmem:[%s5 + $0x8] sm:$0xf]
  %v245 = vld [vmem:[%s5 + $0xc] sm:$0xf]
  %v246 = vpack.c.bf16 %v237, %v236
  %v247 = vpack.c.bf16 %v241, %v240
  %v252 = vunpack.c.l.b16 %v242
  %v253 = vunpack.c.l.b16 %v243
  %v254 = vunpack.c.l.b16 %v244
  %v255 = vunpack.c.l.b16 %v245
  %v256 = vpack.c.b16 %v253, %v252
  %v257 = vpack.c.b16 %v255, %v254
  %v261 = vsel %vm191, %v246, 0
  %v264 = vsel %vm191, %v247, 0
  %266 = vmatprep.subr.bf16.mxu0 0
  %267 = vmatpush1.bf16.msra.mxu0 0
  %268 = vmatprep.subr.bf16.mxu0 0
  %269 = vmatpush1.bf16.msra.mxu0 0
  %270 = vmatprep.subr.bf16.mxu0 0
  %271 = vmatpush1.bf16.msra.mxu0 0
  %272 = vmatprep.subr.bf16.mxu0 0
  %273 = vmatpush1.bf16.msra.mxu0 0
  %274 = vmatprep.subr.bf16.mxu0 0
  %275 = vmatpush1.bf16.msra.mxu0 0
  %276 = vmatprep.subr.bf16.mxu0 0
  %277 = vmatpush1.bf16.msra.mxu0 0
  %278 = vmatprep.subr.bf16.mxu0 0
  %279 = vmatpush1.bf16.msra.mxu0 %v257
  %280 = vmatprep.subr.bf16.mxu0 0
  %281 = vmatpush1.bf16.msra.mxu0 %v256
  %282 = vmatprep.subr.bf16.mxu0 0
  %283 = vmatpush2.bf16.msra.mxu0 0
  %284 = vmatprep.subr.bf16.mxu0 0
  %285 = vmatpush2.bf16.msra.mxu0 0
  %286 = vmatprep.subr.bf16.mxu0 0
  %287 = vmatpush2.bf16.msra.mxu0 0
  %288 = vmatprep.subr.bf16.mxu0 0
  %289 = vmatpush2.bf16.msra.mxu0 0
  %290 = vmatprep.subr.bf16.mxu0 0
  %291 = vmatpush2.bf16.msra.mxu0 0
  %292 = vmatprep.subr.bf16.mxu0 0
  %293 = vmatpush2.bf16.msra.mxu0 0
  %294 = vmatprep.subr.bf16.mxu0 0
  %295 = vmatpush2.bf16.msra.mxu0 0
  %296 = vmatprep.subr.bf16.mxu0 0
  %297 = vmatpush2.bf16.msra.mxu0 0
  %298 = vmatprep.mubr.bf16.mxu0 0
  %299 = vmatmul.mubr.bf16.gmra.mxu0 %v261
  %v300 = vpop.f32.mrf.mxu0
  %v301 = vadd.f32 0.0, %v300
  %v302 = vpop.f32.mrf.mxu0
  %v303 = vpop.f32.mrf.mxu0
  %v304 = vadd.f32 0.0, %v303
  %v305 = vpop.f32.mrf.mxu0
  %306 = vmatprep.mubr.bf16.mxu0 0
  %307 = vmatmul.mubr.bf16.gmra.mxu0 %v264
  %v308 = vpop.f32.mrf.mxu0
  %v309 = vadd.f32 0.0, %v308
  %v310 = vpop.f32.mrf.mxu0
  %v311 = vpop.f32.mrf.mxu0
  %v312 = vadd.f32 0.0, %v311
  %v313 = vpop.f32.mrf.mxu0
  %314 = vdwg.mxu0
  %317 = vrot.lane.b32.xlu0 %v309, 4
  %v318 = vpop.permute.xlu0 %317
  %319 = vrot.lane.b32.xlu0 %v312, 4
  %v320 = vpop.permute.xlu0 %319
  %vm323 = vcmask 31744
  %v324 = vsel %vm323, %v301, %v318
  %v325 = vsel %vm323, %v304, %v320
  %v326 = vpack.c.bf16 %v325, %v324
  %327 = vmatprep.subr.bf16.mxu0 0
  %328 = vmatpush1.bf16.msra.mxu0 0
  %329 = vmatprep.subr.bf16.mxu0 0
  %330 = vmatpush1.bf16.msra.mxu0 0
  %331 = vmatprep.subr.bf16.mxu0 0
  %332 = vmatpush1.bf16.msra.mxu0 0
  %333 = vmatprep.subr.bf16.mxu0 0
  %334 = vmatpush1.bf16.msra.mxu0 0
  %335 = vmatprep.subr.bf16.mxu0 0
  %336 = vmatpush1.bf16.msra.mxu0 0
  %337 = vmatprep.subr.bf16.mxu0 0
  %338 = vmatpush1.bf16.msra.mxu0 0
  %339 = vmatprep.subr.bf16.mxu0 0
  %340 = vmatpush1.bf16.msra.mxu0 0
  %341 = vmatprep.subr.bf16.mxu0 0
  %342 = vmatpush1.bf16.msra.mxu0 %v326
  %343 = vmatprep.subr.bf16.mxu0 0
  %344 = vmatpush2.bf16.msra.mxu0 0
  %345 = vmatprep.subr.bf16.mxu0 0
  %346 = vmatpush2.bf16.msra.mxu0 0
  %347 = vmatprep.subr.bf16.mxu0 0
  %348 = vmatpush2.bf16.msra.mxu0 0
  %349 = vmatprep.subr.bf16.mxu0 0
  %350 = vmatpush2.bf16.msra.mxu0 0
  %351 = vmatprep.subr.bf16.mxu0 0
  %352 = vmatpush2.bf16.msra.mxu0 0
  %353 = vmatprep.subr.bf16.mxu0 0
  %354 = vmatpush2.bf16.msra.mxu0 0
  %355 = vmatprep.subr.bf16.mxu0 0
  %356 = vmatpush2.bf16.msra.mxu0 0
  %357 = vmatprep.subr.bf16.mxu0 0
  %358 = vmatpush2.bf16.msra.mxu0 0
  %359 = vmatprep.mubr.bf16.mxu0 0
  %360 = vmatmul.mubr.bf16.gmra.mxu0 %v37
  %v361 = vpop.f32.mrf.mxu0
  %v362 = vadd.f32 0.0, %v361
  %v363 = vpop.f32.mrf.mxu0
  %v364 = vpop.f32.mrf.mxu0
  %v365 = vadd.f32 0.0, %v364
  %v366 = vpop.f32.mrf.mxu0
  %367 = vdwg.mxu0
  %370 = vrot.lane.b32.xlu0 %v362, 124
  %v371 = vpop.permute.xlu0 %370
  %372 = vrot.lane.b32.xlu0 %v365, 124
  %v373 = vpop.permute.xlu0 %372
  %376 = vrot.lane.b32.xlu0 %v362, 4
  %v377 = vpop.permute.xlu0 %376
  %378 = vrot.lane.b32.xlu0 %v365, 4
  %v379 = vpop.permute.xlu0 %378
  %v382 = vsel %vm323, %v371, %v377
  %v383 = vsel %vm323, %v373, %v379
  %384 = vst.msk [vmem:[%s6] sm:$0xff] %vm81, %v382
  %385 = vst.msk [vmem:[%s6 + $0x8] sm:$0xff] %vm81, %v383
  // Predicated region
  $region26: #{tpu_custom_call.1} parent=0 // pred_check
    _
  $region27: #{tpu_custom_call.1} parent=0 // pred_check_branch
    %387 = sbr.rel (0) target = $region29
  $region28: #{tpu_custom_call.1} parent=0 // pred_region
    _
  $region29: #{tpu_custom_call.1} parent=0 // pred_fallthru
    _
  // Predicated region
  $region30: #{tpu_custom_call.1} parent=0 // pred_check
    _
  $region31: #{tpu_custom_call.1} parent=0 // pred_check_branch
    %389 = sbr.rel (0) target = $region33
  $region32: #{tpu_custom_call.1} parent=0 // pred_region
    _
  $region33: #{tpu_custom_call.1} parent=0 // pred_fallthru
    _

</llo_original>
